<compile_context>
chip_gen: v7x
topology: tpu7x:2x2x1
jax: 0.10.0
libtpu: 0.0.40
codegen_flags: <defaults>
</compile_context>

<pallas_src>
import functools

import jax
import jax.numpy as jnp
from jax.experimental import pallas as pl
from jax.experimental.pallas import tpu as pltpu

LANE = 128
SUBLANE_BF16 = 16  # bf16 packs 16 sublanes per vreg; align slab sections to it


def _round_up(n, m):
    return ((n + m - 1) // m) * m


@functools.lru_cache(maxsize=None)
def _make_kernel(state_dim, hidden_dim, out_pad, r_w1, r_w2, r_w3, r_b):
    """Fused 3-layer MLP kernel with static offsets into the parameter slab."""

    def kernel(x_ref, p_ref, o_ref):
        # Activations arrive f32; cast to bf16 in-kernel (free VPU filler).
        x = x_ref[...].astype(jnp.bfloat16)                      # (TB, S)

        # Static slices of the single VMEM-resident bf16 parameter slab.
        w1 = p_ref[r_w1:r_w1 + state_dim, 0:hidden_dim]          # (S, H)
        w2 = p_ref[r_w2:r_w2 + hidden_dim, 0:hidden_dim]         # (H, H)
        w3 = p_ref[r_w3:r_w3 + hidden_dim, 0:out_pad]            # (H, 128)
        b1 = p_ref[r_b + 0:r_b + 1, 0:hidden_dim]                # (1, H)
        b2 = p_ref[r_b + 1:r_b + 2, 0:hidden_dim]                # (1, H)
        b3 = p_ref[r_b + 2:r_b + 3, 0:out_pad]                   # (1, 128)

        # bf16 matmul operands, f32 accumulation (+ bias promotes to f32).
        h1 = jnp.dot(x, w1, preferred_element_type=jnp.float32) + b1
        h1 = jnp.maximum(h1, 0.0).astype(jnp.bfloat16)
        h2 = jnp.dot(h1, w2, preferred_element_type=jnp.float32) + b2
        h2 = jnp.maximum(h2, 0.0).astype(jnp.bfloat16)
        out = jnp.dot(h2, w3, preferred_element_type=jnp.float32) + b3

        # Lane-dense bf16 store: unmasked vst, half the writeback of f32.
        o_ref[...] = out.astype(jnp.bfloat16)

    return kernel


def prepare_params(params):
    """Pack all Net parameters into a single bf16, lane-dense slab.

    Done ONCE per parameter update (hoisted out of the forward path): all
    casts / zero-padding happen here, not per call.

    params: dict with w1 (S,H), b1 (1,H), w2 (H,H), b2 (1,H), w3 (H,A),
            b3 (1,A), f32, weights laid out as (in_features, out_features).
    """
    w1, b1 = params["w1"], params["b1"]
    w2, b2 = params["w2"], params["b2"]
    w3, b3 = params["w3"], params["b3"]

    state_dim, hidden_dim = int(w1.shape[0]), int(w1.shape[1])
    action_dim = int(w3.shape[1])
    out_pad = _round_up(action_dim, LANE)            # lane-dense output width
    width = _round_up(max(hidden_dim, out_pad), LANE)

    # Section row offsets, aligned to bf16 sublane packing (16 rows).
    r_w1 = 0
    r_w2 = _round_up(r_w1 + state_dim, SUBLANE_BF16)
    r_w3 = _round_up(r_w2 + hidden_dim, SUBLANE_BF16)
    r_b = _round_up(r_w3 + hidden_dim, SUBLANE_BF16)
    rows = _round_up(r_b + 3, SUBLANE_BF16)

    slab = jnp.zeros((rows, width), jnp.float32)
    slab = slab.at[r_w1:r_w1 + state_dim, :hidden_dim].set(w1)
    slab = slab.at[r_w2:r_w2 + hidden_dim, :hidden_dim].set(w2)
    slab = slab.at[r_w3:r_w3 + hidden_dim, :action_dim].set(w3)
    slab = slab.at[r_b + 0, :hidden_dim].set(b1.reshape(-1))
    slab = slab.at[r_b + 1, :hidden_dim].set(b2.reshape(-1))
    slab = slab.at[r_b + 2, :action_dim].set(b3.reshape(-1))
    slab = slab.astype(jnp.bfloat16)

    meta = dict(state_dim=state_dim, hidden_dim=hidden_dim,
                action_dim=action_dim, out_pad=out_pad,
                r_w1=r_w1, r_w2=r_w2, r_w3=r_w3, r_b=r_b)
    return slab, meta


def net_forward(x, prepared, *, block_batch=1024):
    """Forward pass of Net.

    x: (B, state_dim) float32.
    prepared: output of prepare_params(params).
    Returns (B, action_dim) float32 Q-values.
    """
    slab, meta = prepared
    state_dim = meta["state_dim"]
    hidden_dim = meta["hidden_dim"]
    action_dim = meta["action_dim"]
    out_pad = meta["out_pad"]

    B = x.shape[0]
    assert x.shape[1] == state_dim

    # Batch blocking: TB multiple of 8; force >= 2 grid steps when the batch
    # allows it so the "parallel" axis can shard across both v7x TensorCores.
    b8 = _round_up(max(B, 1), 8)
    tb = min(block_batch, b8)
    if b8 // tb < 2 and b8 >= 16:
        tb = _round_up((b8 + 1) // 2, 8)
    b_pad = _round_up(b8, tb)

    # Pad batch rows only when needed (skip the copy if B already fits).
    if b_pad == B:
        x_p = x
    else:
        x_p = jnp.zeros((b_pad, state_dim), x.dtype).at[:B, :].set(x)

    kernel = _make_kernel(state_dim, hidden_dim, out_pad,
                          meta["r_w1"], meta["r_w2"], meta["r_w3"], meta["r_b"])

    grid = (b_pad // tb,)

    # Real traffic: x in (f32), params slab (bf16), bf16 out slab.
    slab_bytes = slab.size * slab.dtype.itemsize
    bytes_accessed = b_pad * state_dim * 4 + slab_bytes + b_pad * out_pad * 2
    flops = 2 * b_pad * (state_dim * hidden_dim
                         + hidden_dim * hidden_dim
                         + hidden_dim * out_pad)

    # Scoped-VMEM budget derived from actual buffers (x/out double-buffered,
    # slab resident, f32 intermediates), with headroom; far below v7x's 64 MiB.
    per_step = (2 * (tb * state_dim * 4 + tb * out_pad * 2)
                + 2 * slab_bytes
                + tb * (2 * hidden_dim * 4 + out_pad * 4))
    vmem_limit = int(min(48 * 1024 * 1024, max(8 * 1024 * 1024, 2 * per_step)))

    out = pl.pallas_call(
        kernel,
        out_shape=jax.ShapeDtypeStruct((b_pad, out_pad), jnp.bfloat16),
        grid=grid,
        in_specs=[
            pl.BlockSpec((tb, state_dim), lambda i: (i, 0)),   # x batch block
            pl.BlockSpec(slab.shape, lambda i: (0, 0)),        # resident params
        ],
        out_specs=pl.BlockSpec((tb, out_pad), lambda i: (i, 0)),
        compiler_params=pltpu.CompilerParams(
            dimension_semantics=("parallel",),   # shard batch across TCs (v7x)
            vmem_limit_bytes=vmem_limit,
        ),
        cost_estimate=pl.CostEstimate(
            flops=flops, transcendentals=0, bytes_accessed=bytes_accessed),
    )(x_p, slab)

    # Slice off batch/lane padding; return f32 Q-values (module semantics).
    return out[:B, :action_dim].astype(jnp.float32)


def init_params(key, state_dim=8, action_dim=4, hidden_dim=32):
    """Deterministic synthetic init (PyTorch-style uniform fan-in bounds)."""
    ks = jax.random.split(key, 6)

    def lin(kw, kb, fan_in, fan_out):
        bound = 1.0 / jnp.sqrt(jnp.float32(fan_in))
        w = jax.random.uniform(kw, (fan_in, fan_out), jnp.float32, -bound, bound)
        b = jax.random.uniform(kb, (1, fan_out), jnp.float32, -bound, bound)
        return w, b

    w1, b1 = lin(ks[0], ks[1], state_dim, hidden_dim)
    w2, b2 = lin(ks[2], ks[3], hidden_dim, hidden_dim)
    w3, b3 = lin(ks[4], ks[5], hidden_dim, action_dim)
    return {"w1": w1, "b1": b1, "w2": w2, "b2": b2, "w3": w3, "b3": b3}


if __name__ == "__main__":
    key = jax.random.PRNGKey(0)
    k_x, k_x2, k_p = jax.random.split(key, 3)

    state_dim, action_dim, hidden_dim = 8, 4, 32
    params = init_params(k_p, state_dim, action_dim, hidden_dim)
    prepared = prepare_params(params)   # hoisted out of the forward path

    def ref_forward(xx):
        h1 = jnp.maximum(xx @ params["w1"] + params["b1"], 0.0)
        h2 = jnp.maximum(h1 @ params["w2"] + params["b2"], 0.0)
        return h2 @ params["w3"] + params["b3"]

    # Small test: batch=2 (grid=(1,), padded batch rows sliced off).
    x = jax.random.normal(k_x, (2, state_dim), jnp.float32)
    out = jax.block_until_ready(net_forward(x, prepared))
    assert out.shape == (2, action_dim)
    assert out.dtype == jnp.float32
    assert jnp.allclose(out, ref_forward(x), atol=5e-2, rtol=5e-2), (out, ref_forward(x))

    # Multi-block test: batch=64 -> tb=32, grid=(2,) (dual-TC split path, no pad copy).
    x2 = jax.random.normal(k_x2, (64, state_dim), jnp.float32)
    out2 = jax.block_until_ready(net_forward(x2, prepared))
    assert out2.shape == (64, action_dim)
    assert jnp.allclose(out2, ref_forward(x2), atol=5e-2, rtol=5e-2)

    print("KERNEL_OK")
</pallas_src>

<mosaic_0001>
module attributes {stable_mosaic.version = 11 : i64} {
  func.func @kernel(%arg0: i32, %arg1: memref<8x8xf32, #tpu.memory_space<vmem>>, %arg2: memref<96x128xbf16, #tpu.memory_space<vmem>>, %arg3: memref<8x128xbf16, #tpu.memory_space<vmem>>) attributes {dimension_semantics = [#tpu.dimension_semantics<parallel>], iteration_bounds = array<i64: 1>, scalar_prefetch = 0 : i64, scratch_operands = 0 : i64, tpu.core_type = #tpu.core_type<tc>, window_params = [{transform_indices = @transform_0, window_bounds = array<i64: 8, 8>}, {pipeline_mode = #tpu.pipeline_mode<synchronous>, transform_indices = @transform_1, window_bounds = array<i64: 96, 128>}, {transform_indices = @transform_2, window_bounds = array<i64: 8, 128>}]} {
    %c0 = arith.constant 0 : index
    %c0_0 = arith.constant 0 : index
    %0 = vector.load %arg1[%c0, %c0_0] : memref<8x8xf32, #tpu.memory_space<vmem>>, vector<8x8xf32>
    %1 = arith.truncf %0 : vector<8x8xf32> to vector<8x8xbf16>
    %c0_1 = arith.constant 0 : index
    %c0_2 = arith.constant 0 : index
    %2 = vector.load %arg2[%c0_1, %c0_2] : memref<96x128xbf16, #tpu.memory_space<vmem>>, vector<8x32xbf16>
    %c16 = arith.constant 16 : index
    %c0_3 = arith.constant 0 : index
    %3 = vector.load %arg2[%c16, %c0_3] : memref<96x128xbf16, #tpu.memory_space<vmem>>, vector<32x32xbf16>
    %c48 = arith.constant 48 : index
    %c0_4 = arith.constant 0 : index
    %4 = vector.load %arg2[%c48, %c0_4] : memref<96x128xbf16, #tpu.memory_space<vmem>>, vector<32x128xbf16>
    %c80 = arith.constant 80 : index
    %c0_5 = arith.constant 0 : index
    %5 = vector.load %arg2[%c80, %c0_5] : memref<96x128xbf16, #tpu.memory_space<vmem>>, vector<1x32xbf16>
    %c81 = arith.constant 81 : index
    %c0_6 = arith.constant 0 : index
    %6 = vector.load %arg2[%c81, %c0_6] : memref<96x128xbf16, #tpu.memory_space<vmem>>, vector<1x32xbf16>
    %c82 = arith.constant 82 : index
    %c0_7 = arith.constant 0 : index
    %7 = vector.load %arg2[%c82, %c0_7] : memref<96x128xbf16, #tpu.memory_space<vmem>>, vector<1x128xbf16>
    %cst = arith.constant dense<0.000000e+00> : vector<8x32xf32>
    %8 = tpu.matmul %1, %2, %cst {dimension_numbers = #tpu.dot_dimension_numbers<[1], [0], [0], [1], [0, 0, 1, 1], [], []>} : vector<8x8xbf16>, vector<8x32xbf16>, vector<8x32xf32> -> vector<8x32xf32>
    %9 = arith.extf %5 : vector<1x32xbf16> to vector<1x32xf32>
    %10 = vector.broadcast %9 : vector<1x32xf32> to vector<8x32xf32>
    %11 = arith.addf %8, %10 : vector<8x32xf32>
    %cst_8 = arith.constant 0.000000e+00 : f32
    %12 = vector.broadcast %cst_8 : f32 to vector<8x32xf32>
    %13 = arith.maximumf %11, %12 : vector<8x32xf32>
    %14 = arith.truncf %13 : vector<8x32xf32> to vector<8x32xbf16>
    %cst_9 = arith.constant dense<0.000000e+00> : vector<8x32xf32>
    %15 = tpu.matmul %14, %3, %cst_9 {dimension_numbers = #tpu.dot_dimension_numbers<[1], [0], [0], [1], [0, 0, 1, 1], [], []>} : vector<8x32xbf16>, vector<32x32xbf16>, vector<8x32xf32> -> vector<8x32xf32>
    %16 = arith.extf %6 : vector<1x32xbf16> to vector<1x32xf32>
    %17 = vector.broadcast %16 : vector<1x32xf32> to vector<8x32xf32>
    %18 = arith.addf %15, %17 : vector<8x32xf32>
    %cst_10 = arith.constant 0.000000e+00 : f32
    %19 = vector.broadcast %cst_10 : f32 to vector<8x32xf32>
    %20 = arith.maximumf %18, %19 : vector<8x32xf32>
    %21 = arith.truncf %20 : vector<8x32xf32> to vector<8x32xbf16>
    %cst_11 = arith.constant dense<0.000000e+00> : vector<8x128xf32>
    %22 = tpu.matmul %21, %4, %cst_11 {dimension_numbers = #tpu.dot_dimension_numbers<[1], [0], [0], [1], [0, 0, 1, 1], [], []>} : vector<8x32xbf16>, vector<32x128xbf16>, vector<8x128xf32> -> vector<8x128xf32>
    %23 = arith.extf %7 : vector<1x128xbf16> to vector<1x128xf32>
    %24 = vector.broadcast %23 : vector<1x128xf32> to vector<8x128xf32>
    %25 = arith.addf %22, %24 : vector<8x128xf32>
    %26 = arith.truncf %25 : vector<8x128xf32> to vector<8x128xbf16>
    %c0_12 = arith.constant 0 : index
    %c0_13 = arith.constant 0 : index
    %27 = vector.load %arg3[%c0_12, %c0_13] : memref<8x128xbf16, #tpu.memory_space<vmem>>, vector<8x128xbf16>
    tpu.vector_store %arg3[%c0_12, %c0_13], %26 {strides = array<i32>} : memref<8x128xbf16, #tpu.memory_space<vmem>>, vector<8x128xbf16>,
    return
  }
  func.func @transform_0(%arg0: i32) -> (i32, i32) {
    %c0_i32 = arith.constant 0 : i32
    %c0_i32_0 = arith.constant 0 : i32
    return %arg0, %c0_i32 : i32, i32
  }
  func.func @transform_1(%arg0: i32) -> (i32, i32) {
    %c0_i32 = arith.constant 0 : i32
    %c0_i32_0 = arith.constant 0 : i32
    %c0_i32_1 = arith.constant 0 : i32
    return %c0_i32, %c0_i32_0 : i32, i32
  }
  func.func @transform_2(%arg0: i32) -> (i32, i32) {
    %c0_i32 = arith.constant 0 : i32
    %c0_i32_0 = arith.constant 0 : i32
    return %arg0, %c0_i32 : i32, i32
  }
}

</mosaic_0001>

<llo_original>
// kernel: tpu_custom_call.1
$region0: #{tpu_custom_call.1}
  #allocation0 [shape = 'u32[]', space=smem, size = 0x4, offset = 0x4, fixed_abs, tag = 'smem constant byte address 0x4 - core index']
  #allocation1 [shape = 'u32[144,128]{1,0:T(1,128)}', space=vmem, size = 0x12000, scoped, tag = 'internal scratch']
  %s0 = inlined_call_operand.hbm [shape: f32[8,8], index: 0, kind: input, shape index: {}]
  %s1 = inlined_call_operand.hbm [shape: bf16[96,128], index: 1, kind: input, shape index: {}]
  %s2 = inlined_call_operand.hbm [shape: bf16[8,128], index: 2, kind: output, shape index: {}]
  %s3 = sld [smem:[#allocation0]]
  $region26: #{tpu_custom_call.1} parent=0
    _
  %s5 = ssub.s32 1, %s3
  %s6 = scalar_select 0, %s5, %s3
  $region1: #{tpu_custom_call.1} parent=0
    #allocation2 [shape = 'u8[4096]{0}', space=vmem, size = 0x1000, scoped, tag = 'input window, operand 0, single buffered']
    #allocation3 [shape = 's32[1]{0}', space=sflag, size = 0x4, scoped, tag = 'scoped memory for tpu_custom_call.1']
    #allocation4 [shape = 's32[1]{0}', space=sflag, size = 0x4, scoped, tag = 'scoped memory for tpu_custom_call.1']
    #allocation5 [shape = 'u8[24576]{0}', space=vmem, size = 0x6000, scoped, tag = 'input window, operand 1, single buffered']
    #allocation6 [shape = 's32[1]{0}', space=sflag, size = 0x4, scoped, tag = 'scoped memory for tpu_custom_call.1']
    #allocation7 [shape = 'u8[2048]{0}', space=vmem, size = 0x800, scoped, tag = 'output window, operand 0, single buffered']
    %7 = vsyncpa [#allocation3], 0
    %8 = vsyncpa [#allocation6], 0
    %9 = vsyncpa [#allocation4], 0
    // Predicated region
    $region2: #{tpu_custom_call.1} parent=1 // pred_check
      _
    $region3: #{tpu_custom_call.1} parent=1 // pred_check_branch
      %11 = sbr.rel (0) target = $region5
    $region4: #{tpu_custom_call.1} parent=1 // pred_region
      %s13 = ssub.s32 128, 128
      %14 = vsyncadd [#allocation3], %s13
      %s16 = sshll.u32 [#allocation2], 4
      %s17 = int_to_ptr.vmem [resolvable:$true] %s16
      %19 = dma.hbm_to_vmem [thread:$0]  %s0, 128, %s17, [#allocation3]
    $region5: #{tpu_custom_call.1} parent=1 // pred_fallthru
      _
    // Predicated region
    $region6: #{tpu_custom_call.1} parent=1 // pred_check
      _
    $region7: #{tpu_custom_call.1} parent=1 // pred_check_branch
      %21 = sbr.rel (0) target = $region9
    $region8: #{tpu_custom_call.1} parent=1 // pred_region
      %s23 = ssub.s32 768, 768
      %24 = vsyncadd [#allocation6], %s23
      %s25 = sshll.u32 [#allocation5], 4
      %s26 = int_to_ptr.vmem [resolvable:$true] %s25
      %31 = dma.hbm_to_vmem [thread:$0]  %s1, 768, %s26, [#allocation6], 64, 64, 4
    $region9: #{tpu_custom_call.1} parent=1 // pred_fallthru
      _
    // Predicated region
    $region10: #{tpu_custom_call.1} parent=1 // pred_check
      _
    $region11: #{tpu_custom_call.1} parent=1 // pred_check_branch
      %33 = sbr.rel (0) target = $region13
    $region12: #{tpu_custom_call.1} parent=1 // pred_region
      %34 = dma.done [#allocation3], 128
    $region13: #{tpu_custom_call.1} parent=1 // pred_fallthru
      _
    // Predicated region
    $region14: #{tpu_custom_call.1} parent=1 // pred_check
      _
    $region15: #{tpu_custom_call.1} parent=1 // pred_check_branch
      %36 = sbr.rel (0) target = $region17
    $region16: #{tpu_custom_call.1} parent=1 // pred_region
      %37 = dma.done [#allocation6], 768
    $region17: #{tpu_custom_call.1} parent=1 // pred_fallthru
      _
    %v39 = vld [vmem:[#allocation2] sm:$0xff]
    %v40 = vpack.c.bf16 %v39, %v39
    %v41 = vld [vmem:[#allocation5] sm:$0xf]
    %v42 = vld [vmem:[#allocation5 + $0x8] sm:$0xf]
    %v43 = vld [vmem:[#allocation5 + $0xc] sm:$0xf]
    %v44 = vld [vmem:[#allocation5 + $0x10] sm:$0xf]
    %v45 = vld [vmem:[#allocation5 + $0x14] sm:$0xf]
    %v46 = vld [vmem:[#allocation5 + $0x18] sm:$0xf]
    %v47 = vld [vmem:[#allocation5 + $0x1c] sm:$0xf]
    %v48 = vld [vmem:[#allocation5 + $0x20] sm:$0xf]
    %v49 = vld [vmem:[#allocation5 + $0x24] sm:$0xf]
    %v50 = vld [vmem:[#allocation5 + $0x28] sm:$0x1]
    %v51 = vld [vmem:[#allocation5 + $0x28] sm:$0x2]
    %v52 = vunpack.c.l.bf16 %v50
    %v53 = vlaneseq
    %v54 = vshrl.u32 %v53, 7
    %v55 = vsub.s32 0, %v54
    %v56 = vrot.slane %v52, %v55
    %vm57 = vcmask 64512
    %v59 = vsel %vm57, %v40, 0
    %vm61 = vcmask 1043456
    %v63 = vsel %vm61, %v41, 0
    %65 = vmatprep.subr.bf16.mxu0 0
    %66 = vmatpush1.bf16.msra.mxu0 %v63
    %67 = vmatprep.subr.bf16.mxu0 0
    %68 = vmatpush1.bf16.msra.mxu0 0
    %69 = vmatprep.subr.bf16.mxu0 0
    %70 = vmatpush1.bf16.msra.mxu0 0
    %71 = vmatprep.subr.bf16.mxu0 0
    %72 = vmatpush1.bf16.msra.mxu0 0
    %73 = vmatprep.subr.bf16.mxu0 0
    %74 = vmatpush1.bf16.msra.mxu0 0
    %75 = vmatprep.subr.bf16.mxu0 0
    %76 = vmatpush1.bf16.msra.mxu0 0
    %77 = vmatprep.subr.bf16.mxu0 0
    %78 = vmatpush1.bf16.msra.mxu0 0
    %79 = vmatprep.subr.bf16.mxu0 0
    %80 = vmatpush1.bf16.msra.mxu0 0
    %81 = vmatprep.subr.bf16.mxu0 0
    %82 = vmatpush1.bf16.msra.mxu0 0
    %83 = vmatprep.subr.bf16.mxu0 0
    %84 = vmatpush1.bf16.msra.mxu0 0
    %85 = vmatprep.subr.bf16.mxu0 0
    %86 = vmatpush1.bf16.msra.mxu0 0
    %87 = vmatprep.subr.bf16.mxu0 0
    %88 = vmatpush1.bf16.msra.mxu0 0
    %89 = vmatprep.subr.bf16.mxu0 0
    %90 = vmatpush1.bf16.msra.mxu0 0
    %91 = vmatprep.subr.bf16.mxu0 0
    %92 = vmatpush1.bf16.msra.mxu0 0
    %93 = vmatprep.subr.bf16.mxu0 0
    %94 = vmatpush1.bf16.msra.mxu0 0
    %95 = vmatprep.subr.bf16.mxu0 0
    %96 = vmatpush1.bf16.msra.mxu0 0
    %97 = vmatprep.mubr.bf16.mxu0 0
    %98 = vmatmul.mubr.bf16.gmra.mrb[0].mxu0 %v59
    %v99 = vpop.f32.mrb[0].mxu0
    %v100 = vadd.f32 %v56, %v99
    %v101 = vpop.f32.mrb[0].mxu0
    %v102 = vpop.f32.mrb[0].mxu0
    %v103 = vpop.f32.mrb[0].mxu0
    %104 = vdwg.mxu0
    %v105 = vmax.f32 %v100, 0.0
    %v106 = vpack.c.bf16 %v105, %v105
    %v107 = vlaneseq
    %v108 = vshrl.u32 %v107, 7
    %v109 = vsub.s32 1, %v108
    %v110 = vrot.slane %v52, %v109
    %v115 = vunpack.c.l.b16 %v42
    %v116 = vunpack.c.l.b16 %v43
    %v117 = vunpack.c.l.b16 %v44
    %v118 = vunpack.c.l.b16 %v45
    %v119 = vpack.c.b16 %v116, %v115
    %v120 = vpack.c.b16 %v118, %v117
    %vm123 = vcmask 261120
    %v125 = vsel %vm123, %v106, 0
    %127 = vmatprep.subr.bf16.mxu0 0
    %128 = vmatpush1.bf16.msra.mxu0 %v119
    %129 = vmatprep.subr.bf16.mxu0 0
    %130 = vmatpush1.bf16.msra.mxu0 %v120
    %131 = vmatprep.subr.bf16.mxu0 0
    %132 = vmatpush1.bf16.msra.mxu0 0
    %133 = vmatprep.subr.bf16.mxu0 0
    %134 = vmatpush1.bf16.msra.mxu0 0
    %135 = vmatprep.subr.bf16.mxu0 0
    %136 = vmatpush1.bf16.msra.mxu0 0
    %137 = vmatprep.subr.bf16.mxu0 0
    %138 = vmatpush1.bf16.msra.mxu0 0
    %139 = vmatprep.subr.bf16.mxu0 0
    %140 = vmatpush1.bf16.msra.mxu0 0
    %141 = vmatprep.subr.bf16.mxu0 0
    %142 = vmatpush1.bf16.msra.mxu0 0
    %143 = vmatprep.subr.bf16.mxu0 0
    %144 = vmatpush1.bf16.msra.mxu0 0
    %145 = vmatprep.subr.bf16.mxu0 0
    %146 = vmatpush1.bf16.msra.mxu0 0
    %147 = vmatprep.subr.bf16.mxu0 0
    %148 = vmatpush1.bf16.msra.mxu0 0
    %149 = vmatprep.subr.bf16.mxu0 0
    %150 = vmatpush1.bf16.msra.mxu0 0
    %151 = vmatprep.subr.bf16.mxu0 0
    %152 = vmatpush1.bf16.msra.mxu0 0
    %153 = vmatprep.subr.bf16.mxu0 0
    %154 = vmatpush1.bf16.msra.mxu0 0
    %155 = vmatprep.subr.bf16.mxu0 0
    %156 = vmatpush1.bf16.msra.mxu0 0
    %157 = vmatprep.subr.bf16.mxu0 0
    %158 = vmatpush1.bf16.msra.mxu0 0
    %159 = vmatprep.mubr.bf16.mxu0 0
    %160 = vmatmul.mubr.bf16.gmra.mrb[0].mxu0 %v125
    %v161 = vpop.f32.mrb[0].mxu0
    %v162 = vadd.f32 %v110, %v161
    %v163 = vpop.f32.mrb[0].mxu0
    %v164 = vpop.f32.mrb[0].mxu0
    %v165 = vpop.f32.mrb[0].mxu0
    %166 = vdwg.mxu0
    %v167 = vmax.f32 %v162, 0.0
    %v168 = vpack.c.bf16 %v167, %v167
    %v169 = vunpack.c.l.bf16 %v51
    %v170 = vlaneseq
    %v171 = vshrl.u32 %v170, 7
    %v172 = vsub.s32 2, %v171
    %v173 = vrot.slane %v169, %v172
    %v178 = vunpack.c.l.b16 %v46
    %v179 = vunpack.c.l.b16 %v47
    %v180 = vunpack.c.l.b16 %v48
    %v181 = vunpack.c.l.b16 %v49
    %v182 = vpack.c.b16 %v179, %v178
    %v183 = vpack.c.b16 %v181, %v180
    %v187 = vsel %vm123, %v168, 0
    %189 = vmatprep.subr.bf16.mxu0 0
    %190 = vmatpush1.bf16.msra.mxu0 %v182
    %191 = vmatprep.subr.bf16.mxu0 0
    %192 = vmatpush1.bf16.msra.mxu0 %v183
    %193 = vmatprep.subr.bf16.mxu0 0
    %194 = vmatpush1.bf16.msra.mxu0 0
    %195 = vmatprep.subr.bf16.mxu0 0
    %196 = vmatpush1.bf16.msra.mxu0 0
    %197 = vmatprep.subr.bf16.mxu0 0
    %198 = vmatpush1.bf16.msra.mxu0 0
    %199 = vmatprep.subr.bf16.mxu0 0
    %200 = vmatpush1.bf16.msra.mxu0 0
    %201 = vmatprep.subr.bf16.mxu0 0
    %202 = vmatpush1.bf16.msra.mxu0 0
    %203 = vmatprep.subr.bf16.mxu0 0
    %204 = vmatpush1.bf16.msra.mxu0 0
    %205 = vmatprep.subr.bf16.mxu0 0
    %206 = vmatpush1.bf16.msra.mxu0 0
    %207 = vmatprep.subr.bf16.mxu0 0
    %208 = vmatpush1.bf16.msra.mxu0 0
    %209 = vmatprep.subr.bf16.mxu0 0
    %210 = vmatpush1.bf16.msra.mxu0 0
    %211 = vmatprep.subr.bf16.mxu0 0
    %212 = vmatpush1.bf16.msra.mxu0 0
    %213 = vmatprep.subr.bf16.mxu0 0
    %214 = vmatpush1.bf16.msra.mxu0 0
    %215 = vmatprep.subr.bf16.mxu0 0
    %216 = vmatpush1.bf16.msra.mxu0 0
    %217 = vmatprep.subr.bf16.mxu0 0
    %218 = vmatpush1.bf16.msra.mxu0 0
    %219 = vmatprep.subr.bf16.mxu0 0
    %220 = vmatpush1.bf16.msra.mxu0 0
    %221 = vmatprep.mubr.bf16.mxu0 0
    %222 = vmatmul.mubr.bf16.gmra.mrb[0].mxu0 %v187
    %v223 = vpop.f32.mrb[0].mxu0
    %v224 = vadd.f32 %v173, %v223
    %v225 = vpop.f32.mrb[0].mxu0
    %v226 = vpop.f32.mrb[0].mxu0
    %v227 = vpop.f32.mrb[0].mxu0
    %228 = vdwg.mxu0
    %v229 = vpack.c.bf16 %v224, %v224
    %230 = vst [vmem:[#allocation7] sm:$0xf] %v229
    // Predicated region
    $region18: #{tpu_custom_call.1} parent=1 // pred_check
      _
    $region19: #{tpu_custom_call.1} parent=1 // pred_check_branch
      %232 = sbr.rel (0) target = $region21
    $region20: #{tpu_custom_call.1} parent=1 // pred_region
      %s234 = ssub.s32 64, 64
      %235 = vsyncadd [#allocation4], %s234
      %s237 = sshll.u32 [#allocation7], 4
      %s238 = int_to_ptr.vmem [resolvable:$true] %s237
      %240 = dma.vmem_to_hbm [thread:$0]  %s238, 64, %s2, [#allocation4]
    $region21: #{tpu_custom_call.1} parent=1 // pred_fallthru
      _
    // Predicated region
    $region22: #{tpu_custom_call.1} parent=1 // pred_check
      _
    $region23: #{tpu_custom_call.1} parent=1 // pred_check_branch
      %242 = sbr.rel (0) target = $region25
    $region24: #{tpu_custom_call.1} parent=1 // pred_region
      %243 = dma.done [#allocation4], 64
    $region25: #{tpu_custom_call.1} parent=1 // pred_fallthru
      _
    %244 = vsyncpa [#allocation3], 1
    %245 = vsyncpa [#allocation6], 1
    %246 = vsyncpa [#allocation4], 1

</llo_original>
